<compile_context>
chip_gen: v7x
topology: tpu7x:2x2x1
jax: 0.10.0
libtpu: 0.0.40
codegen_flags: <defaults>
</compile_context>

<pallas_src>
import functools

import jax
import jax.numpy as jnp
from jax.experimental import pallas as pl
from jax.experimental.pallas import tpu as pltpu

EPS = 1e-6   # LayerNormalization eps = 10**-6


def _round_up(n, m):
    return ((n + m - 1) // m) * m


@functools.lru_cache(maxsize=1)
def _vmem_limits():
    """(vmem_limit_bytes, tile_budget_bytes) derived from the chip when possible."""
    try:
        cap = int(pltpu.get_tpu_info().vmem_capacity_bytes)
    except Exception:
        cap = 64 * 1024 * 1024            # v7x-safe fallback (smallest physical VMEM)
    limit = min(cap * 3 // 4, 100 * 1024 * 1024)   # ~96 MiB v5e/v6e, ~48 MiB v7x
    budget = limit * 5 // 8                        # headroom for Mosaic temporaries
    return int(limit), int(budget)


def _pick_block_rows(rows, width, *, n_bufs, budget, bytes_per_elem=4, cap=32768):
    """Largest row tile (multiple of 8) whose n_bufs live f32-sized copies fit budget."""
    rows = int(rows)
    if rows <= 8:
        return max(rows, 1)
    by_vmem = max(8, (budget // max(n_bufs * width * bytes_per_elem, 1)) // 8 * 8)
    return int(min(_round_up(rows, 8), by_vmem, cap))


# ------------------------- stateless dropout keep-mask ------------------------
def _uniform_u32(global_idx_u32, seed_u32):
    """Cheap counter-based hash -> uniform uint32 bits (pure VPU integer ops)."""
    x = global_idx_u32 * jnp.uint32(0x9E3779B1)
    x = x ^ (seed_u32 * jnp.uint32(0x85EBCA77))
    x = x ^ (x >> 15)
    x = x * jnp.uint32(0x2C1B3C6D)
    x = x ^ (x >> 12)
    x = x * jnp.uint32(0x297A2D39)
    x = x ^ (x >> 15)
    return x


def _apply_dropout(y_f32, global_idx_i32, seed_u32, rate):
    # TODO(synk): torch.nn.Dropout's RNG stream cannot be bit-matched; this keeps the
    # same keep-prob / (1-p) scaling semantics with a deterministic stateless hash.
    bits = _uniform_u32(global_idx_i32.astype(jnp.uint32), seed_u32)
    thresh = jnp.uint32(min(int(rate * 4294967296.0), 4294967295))
    return jnp.where(bits >= thresh, y_f32 * (1.0 / (1.0 - rate)), 0.0)


# ------------------------------ LayerNorm kernel ------------------------------
def _layernorm_kernel(alpha_ref, bias_ref, x_ref, o_ref):
    x = x_ref[...].astype(jnp.float32)            # torch: x.type(torch.float32)
    d = x.shape[-1]
    mean = jnp.mean(x, axis=-1, keepdims=True)
    diff = x - mean
    # torch.std defaults to the unbiased estimator (divide by N-1).
    # TODO(synk): d == 1 divides by zero, same edge case as torch.std.
    var = jnp.sum(diff * diff, axis=-1, keepdims=True) * (1.0 / (d - 1))
    inv = pl.reciprocal(jnp.sqrt(var) + EPS, approx=True)   # EUP slot, ~free
    o_ref[...] = (alpha_ref[0] * diff * inv + bias_ref[0]).astype(o_ref.dtype)


def layer_norm(x2d, alpha, bias, *, out_dtype=jnp.bfloat16):
    rows, d = x2d.shape
    limit, budget = _vmem_limits()
    # in + out double-buffered + in-kernel f32 temporaries
    block_rows = _pick_block_rows(rows, d, n_bufs=6, budget=budget)
    return pl.pallas_call(
        _layernorm_kernel,
        out_shape=jax.ShapeDtypeStruct((rows, d), out_dtype),
        grid_spec=pltpu.PrefetchScalarGridSpec(
            num_scalar_prefetch=0,
            grid=(pl.cdiv(rows, block_rows),),       # ragged last block, no jnp.pad
            in_specs=[
                pl.BlockSpec(memory_space=pltpu.SMEM),            # alpha (1,)
                pl.BlockSpec(memory_space=pltpu.SMEM),            # bias  (1,)
                pl.BlockSpec((block_rows, d), lambda i: (i, 0)),
            ],
            out_specs=pl.BlockSpec((block_rows, d), lambda i: (i, 0)),
        ),
        compiler_params=pltpu.CompilerParams(
            dimension_semantics=("parallel",),
            vmem_limit_bytes=limit,
        ),
    )(alpha, bias, x2d)


# -------------------------- residual + dropout kernel -------------------------
def _residual_dropout_kernel(seed_ref, x_ref, y_ref, o_ref, *, rate, training):
    x = x_ref[...].astype(jnp.float32)
    y = y_ref[...].astype(jnp.float32)
    if training and rate > 0.0:
        br, lanes = y.shape
        r = jax.lax.broadcasted_iota(jnp.int32, y.shape, 0)
        c = jax.lax.broadcasted_iota(jnp.int32, y.shape, 1)
        gidx = (pl.program_id(0) * br + r) * lanes + c      # global element index
        y = _apply_dropout(y, gidx, seed_ref[0].astype(jnp.uint32), rate)
    o_ref[...] = (x + y).astype(o_ref.dtype)


def residual_add_dropout(x, y, *, rate, training, seed=0, out_dtype=jnp.float32):
    """Elementwise x + dropout(y), lane-dense flattened view, multi-MiB tiles."""
    orig_shape = x.shape
    total = int(x.size)
    d = int(orig_shape[-1])
    y = jnp.asarray(y)

    # Widest lane view that divides the element count (unmasked full-width stores);
    # fall back to the natural (rows, d) view so no pad pass is ever needed.
    lanes = next((l for l in (512, 256, 128) if total % l == 0), d)
    rows = total // lanes
    x2 = x.reshape(rows, lanes)
    y2 = y.reshape(rows, lanes)

    limit, budget = _vmem_limits()
    # 2 ins + 1 out double-buffered + f32 upcast temporaries
    block_rows = _pick_block_rows(rows, lanes, n_bufs=8, budget=budget)

    kernel = functools.partial(_residual_dropout_kernel,
                               rate=float(rate), training=bool(training))
    seed_arr = jnp.array([seed], dtype=jnp.int32)
    out = pl.pallas_call(
        kernel,
        out_shape=jax.ShapeDtypeStruct((rows, lanes), out_dtype),
        grid_spec=pltpu.PrefetchScalarGridSpec(
            num_scalar_prefetch=0,
            grid=(pl.cdiv(rows, block_rows),),
            in_specs=[
                pl.BlockSpec(memory_space=pltpu.SMEM),                 # seed (1,)
                pl.BlockSpec((block_rows, lanes), lambda i: (i, 0)),
                pl.BlockSpec((block_rows, lanes), lambda i: (i, 0)),
            ],
            out_specs=pl.BlockSpec((block_rows, lanes), lambda i: (i, 0)),
        ),
        compiler_params=pltpu.CompilerParams(
            dimension_semantics=("parallel",),
            vmem_limit_bytes=limit,
        ),
    )(seed_arr, x2, y2)
    return out.reshape(orig_shape)


# ------------------ fused kernel for a linear (matmul) sublayer ---------------
def _fused_ln_linear_residual_kernel(seed_ref, alpha_ref, bias_ref, x_ref, w_ref,
                                     o_ref, normed_ref, *, rate, training, d, tn):
    i = pl.program_id(0)
    j = pl.program_id(1)

    @pl.when(j == 0)                       # LayerNorm once per row tile, cached in bf16
    def _():
        x = x_ref[...].astype(jnp.float32)
        mean = jnp.mean(x, axis=-1, keepdims=True)
        diff = x - mean
        var = jnp.sum(diff * diff, axis=-1, keepdims=True) * (1.0 / (d - 1))
        inv = pl.reciprocal(jnp.sqrt(var) + EPS, approx=True)
        normed_ref[...] = (alpha_ref[0] * diff * inv + bias_ref[0]).astype(normed_ref.dtype)

    # bf16 x bf16 -> f32 accumulation on the MXU (W column tile already bf16).
    y = jnp.dot(normed_ref[...], w_ref[...], preferred_element_type=jnp.float32)

    if training and rate > 0.0:
        br = y.shape[0]
        r = jax.lax.broadcasted_iota(jnp.int32, y.shape, 0)
        c = jax.lax.broadcasted_iota(jnp.int32, y.shape, 1)
        gidx = (i * br + r) * d + (j * tn + c)
        y = _apply_dropout(y, gidx, seed_ref[0].astype(jnp.uint32), rate)

    col0 = pl.multiple_of(j * tn, tn)
    x_cols = x_ref[:, pl.ds(col0, tn)].astype(jnp.float32)
    o_ref[...] = (x_cols + y).astype(o_ref.dtype)


def residual_connection_linear(x, w, alpha, bias, *, dropout_rate=0.1,
                               training=False, seed=0, out_dtype=None):
    """Fused x + dropout(LayerNorm(x) @ W): one HBM pass over x, W column-tiled."""
    orig_shape = x.shape
    d = int(orig_shape[-1])
    assert w.shape == (d, d), "residual add requires a square projection"
    if out_dtype is None:
        out_dtype = jnp.promote_types(x.dtype, jnp.float32)   # torch promotes via f32 LN
    w_bf16 = w.astype(jnp.bfloat16)                            # feed the MXU in bf16
    x2d = x.reshape(-1, d)
    rows = x2d.shape[0]

    # Column-tile W so a full (d, d) weight never has to be resident (v7x: 64 MiB VMEM).
    tn = d
    if d > 1024:
        for cand in (512, 256, 128):
            if d % cand == 0:
                tn = cand
                break
        # TODO(synk): very large d not a multiple of 128 keeps tn == d (no col tiling).

    limit, budget = _vmem_limits()
    w_bytes = 2 * d * tn * 2                     # double-buffered bf16 W column tile
    row_budget = max(2 << 20, budget - w_bytes)
    # x in (dbl-buf) + out tiles + bf16 normed scratch + f32 y / f32 x temporaries
    block_rows = _pick_block_rows(rows, d, n_bufs=7, budget=row_budget)
    grid = (pl.cdiv(rows, block_rows), d // tn)

    kernel = functools.partial(_fused_ln_linear_residual_kernel,
                               rate=float(dropout_rate), training=bool(training),
                               d=d, tn=tn)
    seed_arr = jnp.array([seed], dtype=jnp.int32)
    out = pl.pallas_call(
        kernel,
        out_shape=jax.ShapeDtypeStruct((rows, d), out_dtype),
        grid_spec=pltpu.PrefetchScalarGridSpec(
            num_scalar_prefetch=0,
            grid=grid,
            in_specs=[
                pl.BlockSpec(memory_space=pltpu.SMEM),                  # seed  (1,)
                pl.BlockSpec(memory_space=pltpu.SMEM),                  # alpha (1,)
                pl.BlockSpec(memory_space=pltpu.SMEM),                  # bias  (1,)
                pl.BlockSpec((block_rows, d), lambda i, j: (i, 0)),     # x tile (reused over j)
                pl.BlockSpec((d, tn), lambda i, j: (0, j)),             # bf16 W column tile
            ],
            out_specs=pl.BlockSpec((block_rows, tn), lambda i, j: (i, j)),
            scratch_shapes=[pltpu.VMEM((block_rows, d), jnp.bfloat16)], # cached LN(x)
        ),
        compiler_params=pltpu.CompilerParams(
            dimension_semantics=("parallel", "arbitrary"),
            vmem_limit_bytes=limit,
        ),
    )(seed_arr, alpha, bias, x2d, w_bf16)
    return out.reshape(orig_shape)


# -------------------------------- module wrapper ------------------------------
def residual_connection(x, sublayer, alpha, bias, *, dropout_rate=0.1,
                        training=False, seed=0, out_dtype=None,
                        norm_dtype=jnp.bfloat16):
    """x + dropout(sublayer(LayerNorm(x)))  -- matches ResidualConnection.forward.

    `sublayer` is an arbitrary user callable, applied as JAX glue between the
    LayerNorm kernel and the residual+dropout kernel.
    """
    orig_shape = x.shape
    d = orig_shape[-1]
    if out_dtype is None:
        out_dtype = jnp.promote_types(x.dtype, jnp.float32)   # torch promotes via f32 LN
    x2d = x.reshape(-1, d)
    normed = layer_norm(x2d, alpha, bias, out_dtype=norm_dtype)
    y = sublayer(normed.reshape(orig_shape))                   # arbitrary callable (glue)
    return residual_add_dropout(x, y, rate=dropout_rate, training=training,
                                seed=seed, out_dtype=out_dtype)


# ------------------------------------ main ------------------------------------
if __name__ == "__main__":
    B, S, D = 2, 8, 32     # NOTE: D ideally a multiple of 128 for unmasked stores / full MXU
    key = jax.random.PRNGKey(0)
    kx, kw = jax.random.split(key)

    x = jax.random.normal(kx, (B, S, D), dtype=jnp.float32)

    # ResidualConnection parameters (per __init__): alpha=1, bias=0
    alpha = jnp.ones((1,), dtype=jnp.float32)
    bias = jnp.zeros((1,), dtype=jnp.float32)

    # Deterministic example sublayer: a linear projection.
    W = jax.random.normal(kw, (D, D), dtype=jnp.float32) * 0.02
    sublayer = lambda t: jnp.einsum("bsd,de->bse", t.astype(jnp.float32), W)

    # Pure-JAX reference (mirrors the torch code, unbiased std).
    mean = jnp.mean(x, axis=-1, keepdims=True)
    std = jnp.std(x, axis=-1, keepdims=True, ddof=1)
    normed_ref = alpha[0] * (x - mean) / (std + EPS) + bias[0]
    ref = x + sublayer(normed_ref)

    # 1) General path with f32 intermediates: tight check (approx reciprocal only).
    out_f32 = residual_connection(x, sublayer, alpha, bias, dropout_rate=0.1,
                                  training=False, seed=0, norm_dtype=jnp.float32)
    out_f32 = jax.block_until_ready(out_f32)
    assert out_f32.shape == x.shape and out_f32.dtype == jnp.float32
    assert jnp.allclose(out_f32, ref, atol=5e-3, rtol=5e-3), "general (f32) mismatch"

    # 2) General path with default bf16 intermediates (perf default): looser check.
    out_bf = residual_connection(x, sublayer, alpha, bias, dropout_rate=0.1,
                                 training=False, seed=0)
    out_bf = jax.block_until_ready(out_bf)
    assert jnp.allclose(out_bf, ref, atol=3e-2, rtol=3e-2), "general (bf16) mismatch"

    # 3) Fused path (known linear sublayer): bf16 MXU feed, W column-tiled.
    out_fused = residual_connection_linear(x, W, alpha, bias,
                                           dropout_rate=0.1, training=False, seed=0)
    out_fused = jax.block_until_ready(out_fused)
    assert out_fused.shape == x.shape
    assert jnp.allclose(out_fused, ref, atol=3e-2, rtol=3e-2), "fused path mismatch"

    # 4) Training/dropout path (not bit-matched to torch RNG).
    out_train = residual_connection_linear(x, W, alpha, bias,
                                           dropout_rate=0.1, training=True, seed=123)
    out_train = jax.block_until_ready(out_train)
    assert out_train.shape == x.shape
    assert bool(jnp.all(jnp.isfinite(out_train)))

    # 5) Dropout statistics sanity (rate=0.5 keeps ~half the sublayer outputs).
    out_drop = residual_add_dropout(x, sublayer(normed_ref), rate=0.5,
                                    training=True, seed=7)
    out_drop = jax.block_until_ready(out_drop)
    frac_changed = float(jnp.mean((out_drop != x).astype(jnp.float32)))
    assert 0.2 < frac_changed < 0.8, f"dropout keep fraction off: {frac_changed}"

    print("KERNEL_OK")
</pallas_src>

<mosaic_0001>
module attributes {stable_mosaic.version = 11 : i64} {
  func.func @_layernorm_kernel(%arg0: i32, %arg1: memref<1xf32, #tpu.memory_space<smem>>, %arg2: memref<1xf32, #tpu.memory_space<smem>>, %arg3: memref<16x32xf32, #tpu.memory_space<vmem>>, %arg4: memref<16x32xf32, #tpu.memory_space<vmem>>) attributes {dimension_semantics = [#tpu.dimension_semantics<parallel>], iteration_bounds = array<i64: 1>, scalar_prefetch = 0 : i64, scratch_operands = 0 : i64, tpu.core_type = #tpu.core_type<tc>, window_params = [{transform_indices = @transform_0, window_bounds = array<i64: 1>}, {transform_indices = @transform_1, window_bounds = array<i64: 1>}, {transform_indices = @transform_2, window_bounds = array<i64: 16, 32>}, {transform_indices = @transform_3, window_bounds = array<i64: 16, 32>}]} {
    %c0 = arith.constant 0 : index
    %c0_0 = arith.constant 0 : index
    %0 = vector.load %arg3[%c0, %c0_0] : memref<16x32xf32, #tpu.memory_space<vmem>>, vector<16x32xf32>
    %cst = arith.constant dense<0.000000e+00> : vector<16xf32>
    %1 = vector.multi_reduction <add>, %0, %cst [1] : vector<16x32xf32> to vector<16xf32>
    %2 = vector.shape_cast %1 : vector<16xf32> to vector<16x1xf32>
    %cst_1 = arith.constant 3.200000e+01 : f32
    %3 = vector.broadcast %cst_1 : f32 to vector<16x1xf32>
    %4 = arith.divf %2, %3 : vector<16x1xf32>
    %5 = vector.broadcast %4 : vector<16x1xf32> to vector<16x32xf32>
    %6 = arith.subf %0, %5 : vector<16x32xf32>
    %7 = arith.mulf %6, %6 : vector<16x32xf32>
    %cst_2 = arith.constant dense<0.000000e+00> : vector<16xf32>
    %8 = vector.multi_reduction <add>, %7, %cst_2 [1] : vector<16x32xf32> to vector<16xf32>
    %9 = vector.shape_cast %8 : vector<16xf32> to vector<16x1xf32>
    %cst_3 = arith.constant 0.0322580636 : f32
    %10 = vector.broadcast %cst_3 : f32 to vector<16x1xf32>
    %11 = arith.mulf %9, %10 : vector<16x1xf32>
    %12 = math.sqrt %11 : vector<16x1xf32>
    %cst_4 = arith.constant 9.99999997E-7 : f32
    %13 = vector.broadcast %cst_4 : f32 to vector<16x1xf32>
    %14 = arith.addf %12, %13 : vector<16x1xf32>
    %15 = tpu.reciprocal %14 {approx = true} : vector<16x1xf32> -> vector<16x1xf32>
    %c0_5 = arith.constant 0 : index
    %16 = memref.load %arg1[%c0_5] : memref<1xf32, #tpu.memory_space<smem>>
    %17 = vector.broadcast %16 : f32 to vector<16x32xf32>
    %18 = arith.mulf %17, %6 : vector<16x32xf32>
    %19 = vector.broadcast %15 : vector<16x1xf32> to vector<16x32xf32>
    %20 = arith.mulf %18, %19 : vector<16x32xf32>
    %c0_6 = arith.constant 0 : index
    %21 = memref.load %arg2[%c0_6] : memref<1xf32, #tpu.memory_space<smem>>
    %22 = vector.broadcast %21 : f32 to vector<16x32xf32>
    %23 = arith.addf %20, %22 : vector<16x32xf32>
    %c0_7 = arith.constant 0 : index
    %c0_8 = arith.constant 0 : index
    %24 = vector.load %arg4[%c0_7, %c0_8] : memref<16x32xf32, #tpu.memory_space<vmem>>, vector<16x32xf32>
    tpu.vector_store %arg4[%c0_7, %c0_8], %23 {strides = array<i32>} : memref<16x32xf32, #tpu.memory_space<vmem>>, vector<16x32xf32>,
    return
  }
  func.func @transform_0(%arg0: i32) -> i32 {
    %c0_i32 = arith.constant 0 : i32
    %c0_i32_0 = arith.constant 0 : i32
    return %c0_i32 : i32
  }
  func.func @transform_1(%arg0: i32) -> i32 {
    %c0_i32 = arith.constant 0 : i32
    %c0_i32_0 = arith.constant 0 : i32
    return %c0_i32 : i32
  }
  func.func @transform_2(%arg0: i32) -> (i32, i32) {
    %c0_i32 = arith.constant 0 : i32
    %c0_i32_0 = arith.constant 0 : i32
    return %arg0, %c0_i32 : i32, i32
  }
  func.func @transform_3(%arg0: i32) -> (i32, i32) {
    %c0_i32 = arith.constant 0 : i32
    %c0_i32_0 = arith.constant 0 : i32
    return %arg0, %c0_i32 : i32, i32
  }
}

</mosaic_0001>

<llo_original>
// kernel: tpu_custom_call.1
$region0: #{tpu_custom_call.1}
  #allocation0 [shape = 'u32[]', space=smem, size = 0x4, offset = 0x4, fixed_abs, tag = 'smem constant byte address 0x4 - core index']
  #allocation1 [shape = 'u32[144,128]{1,0:T(1,128)}', space=vmem, size = 0x12000, scoped, tag = 'internal scratch']
  #allocation2 [shape = 'f32[1]{0:T(128)S(6)}', space=smem, size = 0x200, scoped, tag = 'scoped memory for tpu_custom_call.1']
  #allocation3 [shape = 'f32[1]{0:T(128)S(6)}', space=smem, size = 0x200, scoped, tag = 'scoped memory for tpu_custom_call.1']
  %s0 = inlined_call_operand.<no memory space> [shape: f32[1], index: 0, kind: input, shape index: {}]
  %s1 = inlined_call_operand.<no memory space> [shape: f32[1], index: 1, kind: input, shape index: {}]
  %s2 = inlined_call_operand.hbm [shape: f32[16,32], index: 2, kind: input, shape index: {}]
  %s3 = inlined_call_operand.hbm [shape: f32[16,32], index: 3, kind: output, shape index: {}]
  %s4 = sld [smem:[#allocation0]]
  $region26: #{tpu_custom_call.1} parent=0
    _
  %s6 = ssub.s32 1, %s4
  %s7 = scalar_select 0, %s6, %s4
  %8 = sst [smem:[#allocation2]] %s0
  %9 = sst [smem:[#allocation3]] %s1
  $region1: #{tpu_custom_call.1} parent=0
    #allocation4 [shape = 'u8[8192]{0}', space=vmem, size = 0x2000, scoped, tag = 'input window, operand 2, single buffered']
    #allocation5 [shape = 's32[1]{0}', space=sflag, size = 0x4, scoped, tag = 'scoped memory for tpu_custom_call.1']
    #allocation6 [shape = 's32[1]{0}', space=sflag, size = 0x4, scoped, tag = 'scoped memory for tpu_custom_call.1']
    #allocation7 [shape = 'u8[8192]{0}', space=vmem, size = 0x2000, scoped, tag = 'output window, operand 0, single buffered']
    %10 = vsyncpa [#allocation5], 0
    %11 = vsyncpa [#allocation6], 0
    // Predicated region
    $region2: #{tpu_custom_call.1} parent=1 // pred_check
      _
    $region3: #{tpu_custom_call.1} parent=1 // pred_check_branch
      %13 = sbr.rel (0) target = $region5
    $region4: #{tpu_custom_call.1} parent=1 // pred_region
      _
    $region5: #{tpu_custom_call.1} parent=1 // pred_fallthru
      _
    // Predicated region
    $region6: #{tpu_custom_call.1} parent=1 // pred_check
      _
    $region7: #{tpu_custom_call.1} parent=1 // pred_check_branch
      %15 = sbr.rel (0) target = $region9
    $region8: #{tpu_custom_call.1} parent=1 // pred_region
      _
    $region9: #{tpu_custom_call.1} parent=1 // pred_fallthru
      _
    // Predicated region
    $region10: #{tpu_custom_call.1} parent=1 // pred_check
      _
    $region11: #{tpu_custom_call.1} parent=1 // pred_check_branch
      %17 = sbr.rel (0) target = $region13
    $region12: #{tpu_custom_call.1} parent=1 // pred_region
      %s19 = ssub.s32 256, 256
      %20 = vsyncadd [#allocation5], %s19
      %s21 = sshll.u32 [#allocation4], 4
      %s22 = int_to_ptr.vmem [resolvable:$true] %s21
      %27 = dma.hbm_to_vmem [thread:$0]  %s2, 256, %s22, [#allocation5], 128, 128, 8
    $region13: #{tpu_custom_call.1} parent=1 // pred_fallthru
      _
    // Predicated region
    $region14: #{tpu_custom_call.1} parent=1 // pred_check
      _
    $region15: #{tpu_custom_call.1} parent=1 // pred_check_branch
      %29 = sbr.rel (0) target = $region17
    $region16: #{tpu_custom_call.1} parent=1 // pred_region
      %30 = dma.done [#allocation5], 256
    $region17: #{tpu_custom_call.1} parent=1 // pred_fallthru
      _
    %v31 = vld [vmem:[#allocation4] sm:$0xff]
    %v32 = vld [vmem:[#allocation4 + $0x8] sm:$0xff]
    %vm33 = vcmask 261120
    %v34 = vsel %vm33, %v31, 0.0
    %35 = vadd.xlane.f32.xlu0 %v34
    %v36 = vpop.xlane.xlu0 %35
    %v37 = vsel %vm33, %v32, 0.0
    %38 = vadd.xlane.f32.xlu0 %v37
    %v39 = vpop.xlane.xlu0 %38
    %v40 = vrcp.pop 32.0
    %v41 = vmul.f32 %v36, %v40
    %v42 = vmul.f32 %v39, %v40
    %v43 = vsub.f32 %v31, %v41
    %v44 = vsub.f32 %v32, %v42
    %v45 = vmul.f32 %v43, %v43
    %v46 = vmul.f32 %v44, %v44
    %v47 = vsel %vm33, %v45, 0.0
    %48 = vadd.xlane.f32.xlu0 %v47
    %v49 = vpop.xlane.xlu0 %48
    %v50 = vsel %vm33, %v46, 0.0
    %51 = vadd.xlane.f32.xlu0 %v50
    %v52 = vpop.xlane.xlu0 %51
    %v53 = vmul.f32 %v49, 0.032258064
    %v54 = vmul.f32 %v52, 0.032258064
    %v55 = vrsqrt.pop %v53
    %v56 = vmul.f32 %v53, %v55
    %vm57 = vcmp.eq.f32.partialorder %v53, inf
    %v58 = vsel %vm57, %v53, %v56
    %vm59 = vcmp.eq.f32.partialorder %v53, 0.0
    %v60 = vand.u32 %v53, 2147483648
    %v61 = vsel %vm59, %v60, %v58
    %v62 = vrsqrt.pop %v54
    %v63 = vmul.f32 %v54, %v62
    %vm64 = vcmp.eq.f32.partialorder %v54, inf
    %v65 = vsel %vm64, %v54, %v63
    %vm66 = vcmp.eq.f32.partialorder %v54, 0.0
    %v67 = vand.u32 %v54, 2147483648
    %v68 = vsel %vm66, %v67, %v65
    %v69 = vadd.f32 %v61, 1e-06
    %v70 = vadd.f32 %v68, 1e-06
    %v71 = vrcp.pop %v69
    %v72 = vrcp.pop %v70
    %s73 = sld [smem:[#allocation2]]
    %v74 = vstv %s73
    %v75 = vmul.f32 %v74, %v43
    %v76 = vmul.f32 %v74, %v44
    %v77 = vmul.f32 %v75, %v71
    %v78 = vmul.f32 %v76, %v72
    %s79 = sld [smem:[#allocation3]]
    %v80 = vstv %s79
    %v81 = vadd.f32 %v77, %v80
    %v82 = vadd.f32 %v78, %v80
    %83 = vst.msk [vmem:[#allocation7] sm:$0xff] %vm33, %v81
    %84 = vst.msk [vmem:[#allocation7 + $0x8] sm:$0xff] %vm33, %v82
    // Predicated region
    $region18: #{tpu_custom_call.1} parent=1 // pred_check
      _
    $region19: #{tpu_custom_call.1} parent=1 // pred_check_branch
      %86 = sbr.rel (0) target = $region21
    $region20: #{tpu_custom_call.1} parent=1 // pred_region
      %s88 = ssub.s32 256, 256
      %89 = vsyncadd [#allocation6], %s88
      %s90 = sshll.u32 [#allocation7], 4
      %s91 = int_to_ptr.vmem [resolvable:$true] %s90
      %96 = dma.vmem_to_hbm [thread:$0]  %s91, 256, %s3, [#allocation6], 128, 128, 8
    $region21: #{tpu_custom_call.1} parent=1 // pred_fallthru
      _
    // Predicated region
    $region22: #{tpu_custom_call.1} parent=1 // pred_check
      _
    $region23: #{tpu_custom_call.1} parent=1 // pred_check_branch
      %98 = sbr.rel (0) target = $region25
    $region24: #{tpu_custom_call.1} parent=1 // pred_region
      %99 = dma.done [#allocation6], 256
    $region25: #{tpu_custom_call.1} parent=1 // pred_fallthru
      _
    %100 = vsyncpa [#allocation5], 1
    %101 = vsyncpa [#allocation6], 1

</llo_original>
